<compile_context>
chip_gen: v6e
topology: v6e:2x2x1
jax: 0.10.0
libtpu: 0.0.40
codegen_flags: <defaults>
</compile_context>

<pallas_src>
import functools

import jax
import jax.numpy as jnp
from jax.experimental import pallas as pl
from jax.experimental.pallas import tpu as pltpu


def _mod_rmsnorm_kernel(x_ref, scale_ref, o_ref, *, eps, inv_d):
    # x_ref:     (TT, D) tile for one batch element (batch dim squeezed away)
    # scale_ref: (1, D)  tile for the same batch element (broadcast over rows)
    x = x_ref[...].astype(jnp.float32)
    s = scale_ref[...].astype(jnp.float32)

    # Row statistic: rsqrt(sum(x*x)/D + eps).  Reduce -> XLU, rsqrt -> EUP, so
    # the VALU slots only see a couple of muls + the final cast.
    inv_rms = jax.lax.rsqrt(jnp.sum(x * x, axis=-1, keepdims=True) * inv_d + eps)

    # Fused normalize + modulate (scale broadcasts over the TT rows).
    o_ref[...] = (x * inv_rms * (1.0 + s)).astype(o_ref.dtype)


def _pick_block_t(T, D, itemsize, *, budget_bytes=20 * 1024 * 1024, max_t=1024):
    """Largest multiple-of-16 T-tile whose double-buffered in+out blocks plus
    fp32 working copies fit a conservative VMEM budget (safe on v5e/v6e/v7x)."""
    # per T-row: 2x double-buffered input + 2x double-buffered output
    #            + ~2 fp32 working copies the compiler may materialize.
    per_row = 4 * D * itemsize + 8 * D
    tt = budget_bytes // max(per_row, 1)
    tt = max(16, min(max_t, tt))
    tt = (tt // 16) * 16
    if tt >= T:
        return T  # full extent is always layout-legal (even for tiny T)
    return tt


def modulated_rmsnorm(x, scale, eps=1e-6, block_t=None):
    """x: (B, T, D); scale: (B, 1, D) (or (B, D)). Returns x's shape/dtype."""
    B, T, D = x.shape
    if scale.ndim == 2:
        scale = scale.reshape(B, 1, D)
    if scale.shape != (B, 1, D):
        raise ValueError(f"scale shape {scale.shape} incompatible with x {x.shape}")

    itemsize = jnp.dtype(x.dtype).itemsize
    if block_t is None:
        tt = _pick_block_t(T, D, itemsize)
    else:
        tt = min(int(block_t), T)
        if tt < T:
            tt = max(16, (tt // 16) * 16)

    grid = (B, pl.cdiv(T, tt))

    kernel = functools.partial(
        _mod_rmsnorm_kernel, eps=float(eps), inv_d=1.0 / float(D)
    )

    return pl.pallas_call(
        kernel,
        out_shape=jax.ShapeDtypeStruct((B, T, D), x.dtype),
        grid_spec=pltpu.PrefetchScalarGridSpec(
            num_scalar_prefetch=0,
            grid=grid,
            in_specs=[
                # Kernel sees 2-D (tt, D) / (1, D) refs (leading batch dim
                # squeezed out via `None` in block_shape).
                pl.BlockSpec((None, tt, D), lambda b, t: (b, t, 0)),
                pl.BlockSpec((None, 1, D), lambda b, t: (b, 0, 0)),
            ],
            out_specs=pl.BlockSpec((None, tt, D), lambda b, t: (b, t, 0)),
        ),
        compiler_params=pltpu.CompilerParams(
            # Both grid axes are independent -> megacore can shard either.
            dimension_semantics=("parallel", "parallel"),
            # Covers the ~20 MiB block budget + headroom on every generation
            # (bumps v5e's 16 MiB scoped default; matches v6e/v7x defaults).
            vmem_limit_bytes=32 * 1024 * 1024,
        ),
    )(x, scale)


def _reference(x, scale, eps):
    x_fp32 = x.astype(jnp.float32)
    scale_fp32 = scale.astype(jnp.float32)
    mean_square = jnp.mean(x_fp32 * x_fp32, axis=-1, keepdims=True)
    inv_rms = jax.lax.rsqrt(mean_square + eps)
    return (x_fp32 * inv_rms * (1.0 + scale_fp32)).astype(x.dtype)


if __name__ == "__main__":
    key = jax.random.PRNGKey(0)
    eps = 1e-6
    kx, ks, kx2, ks2 = jax.random.split(key, 4)

    # Test 1: tiny shape (full-extent blocks), bf16 inputs.
    B, T, D = 2, 8, 32
    x = jax.random.normal(kx, (B, T, D), dtype=jnp.bfloat16)
    scale = (0.1 * jax.random.normal(ks, (B, 1, D))).astype(jnp.bfloat16)

    out = jax.block_until_ready(modulated_rmsnorm(x, scale, eps))
    ref = _reference(x, scale, eps)
    assert out.shape == x.shape and out.dtype == x.dtype
    assert jnp.allclose(
        out.astype(jnp.float32), ref.astype(jnp.float32), atol=2e-2, rtol=2e-2
    ), "mismatch vs reference (tiny shape)"

    # Test 2: exercise the tiled-T pipeline path (grid=(B, T//TT)), fp32.
    B2, T2, D2 = 2, 64, 128
    x2 = jax.random.normal(kx2, (B2, T2, D2), dtype=jnp.float32)
    scale2 = 0.1 * jax.random.normal(ks2, (B2, 1, D2), dtype=jnp.float32)

    out2 = jax.block_until_ready(modulated_rmsnorm(x2, scale2, eps, block_t=16))
    ref2 = _reference(x2, scale2, eps)
    assert out2.shape == x2.shape and out2.dtype == x2.dtype
    assert jnp.allclose(out2, ref2, atol=1e-5, rtol=1e-5), "mismatch vs reference (tiled)"

    print("KERNEL_OK")
</pallas_src>

<mosaic_0001>
module attributes {stable_mosaic.version = 11 : i64} {
  func.func @_mod_rmsnorm_kernel(%arg0: i32, %arg1: i32, %arg2: memref<1x8x32xbf16, #tpu.memory_space<vmem>>, %arg3: memref<1x1x32xbf16, #tpu.memory_space<vmem>>, %arg4: memref<1x8x32xbf16, #tpu.memory_space<vmem>>) attributes {dimension_semantics = [#tpu.dimension_semantics<parallel>, #tpu.dimension_semantics<parallel>], iteration_bounds = array<i64: 2, 1>, scalar_prefetch = 0 : i64, scratch_operands = 0 : i64, tpu.core_type = #tpu.core_type<tc>, window_params = [{transform_indices = @transform_0, window_bounds = array<i64: 1, 8, 32>}, {transform_indices = @transform_1, window_bounds = array<i64: 1, 1, 32>}, {transform_indices = @transform_2, window_bounds = array<i64: 1, 8, 32>}]} {
    %c0 = arith.constant 0 : index
    %c0_0 = arith.constant 0 : index
    %c0_1 = arith.constant 0 : index
    %0 = vector.load %arg2[%c0, %c0_0, %c0_1] : memref<1x8x32xbf16, #tpu.memory_space<vmem>>, vector<1x8x32xbf16>
    %1 = vector.shape_cast %0 : vector<1x8x32xbf16> to vector<8x32xbf16>
    %2 = arith.extf %1 : vector<8x32xbf16> to vector<8x32xf32>
    %c0_2 = arith.constant 0 : index
    %c0_3 = arith.constant 0 : index
    %c0_4 = arith.constant 0 : index
    %3 = vector.load %arg3[%c0_2, %c0_3, %c0_4] : memref<1x1x32xbf16, #tpu.memory_space<vmem>>, vector<1x1x32xbf16>
    %4 = vector.shape_cast %3 : vector<1x1x32xbf16> to vector<1x32xbf16>
    %5 = arith.extf %4 : vector<1x32xbf16> to vector<1x32xf32>
    %6 = arith.mulf %2, %2 : vector<8x32xf32>
    %cst = arith.constant dense<0.000000e+00> : vector<8xf32>
    %7 = vector.multi_reduction <add>, %6, %cst [1] : vector<8x32xf32> to vector<8xf32>
    %8 = vector.shape_cast %7 : vector<8xf32> to vector<8x1xf32>
    %cst_5 = arith.constant 3.125000e-02 : f32
    %9 = vector.broadcast %cst_5 : f32 to vector<8x1xf32>
    %10 = arith.mulf %8, %9 : vector<8x1xf32>
    %cst_6 = arith.constant 9.99999997E-7 : f32
    %11 = vector.broadcast %cst_6 : f32 to vector<8x1xf32>
    %12 = arith.addf %10, %11 : vector<8x1xf32>
    %13 = math.rsqrt %12 : vector<8x1xf32>
    %14 = vector.broadcast %13 : vector<8x1xf32> to vector<8x32xf32>
    %15 = arith.mulf %2, %14 : vector<8x32xf32>
    %cst_7 = arith.constant 1.000000e+00 : f32
    %16 = vector.broadcast %cst_7 : f32 to vector<1x32xf32>
    %17 = arith.addf %16, %5 : vector<1x32xf32>
    %18 = vector.broadcast %17 : vector<1x32xf32> to vector<8x32xf32>
    %19 = arith.mulf %15, %18 : vector<8x32xf32>
    %20 = arith.truncf %19 : vector<8x32xf32> to vector<8x32xbf16>
    %c0_8 = arith.constant 0 : index
    %c0_9 = arith.constant 0 : index
    %c0_10 = arith.constant 0 : index
    %21 = vector.load %arg4[%c0_8, %c0_9, %c0_10] : memref<1x8x32xbf16, #tpu.memory_space<vmem>>, vector<1x8x32xbf16>
    %22 = vector.shape_cast %21 : vector<1x8x32xbf16> to vector<8x32xbf16>
    %23 = vector.shape_cast %20 : vector<8x32xbf16> to vector<1x8x32xbf16>
    tpu.vector_store %arg4[%c0_8, %c0_9, %c0_10], %23 {strides = array<i32>} : memref<1x8x32xbf16, #tpu.memory_space<vmem>>, vector<1x8x32xbf16>,
    return
  }
  func.func @transform_0(%arg0: i32, %arg1: i32) -> (i32, i32, i32) {
    %c0_i32 = arith.constant 0 : i32
    %c0_i32_0 = arith.constant 0 : i32
    return %arg0, %arg1, %c0_i32 : i32, i32, i32
  }
  func.func @transform_1(%arg0: i32, %arg1: i32) -> (i32, i32, i32) {
    %c0_i32 = arith.constant 0 : i32
    %c0_i32_0 = arith.constant 0 : i32
    %c0_i32_1 = arith.constant 0 : i32
    return %arg0, %c0_i32, %c0_i32_0 : i32, i32, i32
  }
  func.func @transform_2(%arg0: i32, %arg1: i32) -> (i32, i32, i32) {
    %c0_i32 = arith.constant 0 : i32
    %c0_i32_0 = arith.constant 0 : i32
    return %arg0, %arg1, %c0_i32 : i32, i32, i32
  }
}

</mosaic_0001>

<llo_original>
// kernel: tpu_custom_call.1
$region0: #{tpu_custom_call.1}
  #allocation0 [shape = 'u32[]', space=smem, size = 0x4, offset = 0x4, fixed_abs, tag = 'smem constant byte address 0x4 - core index']
  #allocation1 [shape = 'u32[144,128]{1,0:T(1,128)}', space=vmem, size = 0x12000, scoped, tag = 'internal scratch']
  %s0 = inlined_call_operand.hbm [shape: bf16[2,8,32], index: 0, kind: input, shape index: {}]
  %s1 = inlined_call_operand.vmem [shape: bf16[2,1,32], index: 1, kind: input, shape index: {}]
  %s2 = inlined_call_operand.hbm [shape: bf16[2,8,32], index: 2, kind: output, shape index: {}]
  %s3 = sld [smem:[#allocation0]]
  $region45: #{tpu_custom_call.1} parent=0
    _
  %s5 = ssub.s32 1, %s3
  %s6 = scalar_select 0, %s5, %s3
  $region1: #{tpu_custom_call.1} parent=0
    #allocation2 [shape = 'u8[4096]{0}', space=vmem, size = 0x1000, scoped, tag = 'input window, operand 0']
    #allocation3 [shape = 's32[2]{0}', space=sflag, size = 0x8, scoped, tag = 'scoped memory for tpu_custom_call.1']
    #allocation4 [shape = 's32[2]{0}', space=sflag, size = 0x8, scoped, tag = 'scoped memory for tpu_custom_call.1']
    #allocation5 [shape = 'u8[4096]{0}', space=vmem, size = 0x1000, scoped, tag = 'output window, operand 0']
    %7 = vsyncpa [#allocation3], 0
    %s8 = scalar_lea.sflag [#allocation3], 1
    %9 = vsyncpa %s8, 0
    %10 = vsyncpa [#allocation4], 0
    %s11 = scalar_lea.sflag [#allocation4], 1
    %12 = vsyncpa %s11, 0
    loop: start=0, step=1, limit=4
    $region2: #{tpu_custom_call.1} parent=1 // loop_pre_header
      _
    $region3: #{tpu_custom_call.1} parent=1 // loop_header
      %s14 = sphi 0, %s18
      %p15 = scmp.ge.s32.totalorder %s14, 4
      %s21 = sphi 0, %s33
      %s22 = sphi 0, %s29
      %s23 = sphi 0, %s21
      %s24 = sphi 0, %s22
      %s25 = sphi 0, %s23
      %s26 = sphi 0, %s24
      %s38 = sphi 0, %s40
      %s41 = sphi 0, %s38
      %s42 = sphi 0, %s41
      %s58 = sphi 0, %s42
      %s64 = sphi 0, %s66
      %s67 = sphi 0, %s64
      %s68 = sphi 0, %s67
      %s84 = sphi 0, %s68
      %s92 = sphi 0, %s94
      %s95 = sphi 0, %s92
      %s96 = sphi 0, %s95
      %s112 = sphi 0, %s96
    $region4: #{tpu_custom_call.1} parent=1 // loop_header_branch
      %17 = sbr.rel (%p15) target = $region8
    $region5: #{tpu_custom_call.1} parent=1 // loop_body
      %s19 = ssub.s32 %s14, 1
      %s20 = ssub.s32 %s14, 2
      %s27 = sadd.s32 1, %s22
      %p28 = scmp.ge.s32.totalorder %s27, 1
      %s29 = scalar_select %p28, 0, %s27
      %s30 = sadd.s32 1, %s21
      %s31 = scalar_select %p28, %s30, %s21
      %p32 = scmp.ge.s32.totalorder %s31, 2
      %s33 = scalar_select %p32, 0, %s31
      %s34 = ssub.s32 %s21, %s33
      %s35 = ssub.s32 %s22, %s29
      %s36 = sor.u32 %s34, %s35
      %p37 = scmp.eq.s32.totalorder %s36, 0
      %s39 = sadd.s32 %s38, 1
      %s40 = scalar_select %p37, %s38, %s39
      %p43 = pneg %p37
      %p44 = scmp.eq.s32.totalorder %s14, 1
      %p45 = por %p43, %p44
      %p46 = scmp.ne.s32.totalorder %s38, %s41
      %p47 = scmp.eq.s32.totalorder %s14, 0
      %p48 = por %p46, %p47
      %p49 = scmp.ne.s32.totalorder %s38, %s41
      %p50 = scmp.eq.s32.totalorder %s19, 1
      %p51 = por %p49, %p50
      %p52 = scmp.ne.s32.totalorder %s41, %s42
      %p53 = scmp.eq.s32.totalorder %s19, 0
      %p54 = por %p52, %p53
      %p55 = scmp.ne.s32.totalorder %s41, %s42
      %p56 = scmp.eq.s32.totalorder %s20, 1
      %p57 = por %p55, %p56
      %p59 = scmp.ne.s32.totalorder %s42, %s58
      %p60 = scmp.eq.s32.totalorder %s20, 0
      %p61 = por %p59, %p60
      %s62 = ssub.s32 %s21, %s33
      %p63 = scmp.eq.s32.totalorder %s62, 0
      %s65 = sadd.s32 %s64, 1
      %s66 = scalar_select %p63, %s64, %s65
      %p69 = pneg %p63
      %p70 = scmp.eq.s32.totalorder %s14, 1
      %p71 = por %p69, %p70
      %p72 = scmp.ne.s32.totalorder %s64, %s67
      %p73 = scmp.eq.s32.totalorder %s14, 0
      %p74 = por %p72, %p73
      %p75 = scmp.ne.s32.totalorder %s64, %s67
      %p76 = scmp.eq.s32.totalorder %s19, 1
      %p77 = por %p75, %p76
      %p78 = scmp.ne.s32.totalorder %s67, %s68
      %p79 = scmp.eq.s32.totalorder %s19, 0
      %p80 = por %p78, %p79
      %p81 = scmp.ne.s32.totalorder %s67, %s68
      %p82 = scmp.eq.s32.totalorder %s20, 1
      %p83 = por %p81, %p82
      %p85 = scmp.ne.s32.totalorder %s68, %s84
      %p86 = scmp.eq.s32.totalorder %s20, 0
      %p87 = por %p85, %p86
      %s88 = ssub.s32 %s21, %s33
      %s89 = ssub.s32 %s22, %s29
      %s90 = sor.u32 %s88, %s89
      %p91 = scmp.eq.s32.totalorder %s90, 0
      %s93 = sadd.s32 %s92, 1
      %s94 = scalar_select %p91, %s92, %s93
      %p97 = pneg %p91
      %p98 = scmp.eq.s32.totalorder %s14, 1
      %p99 = por %p97, %p98
      %p100 = scmp.ne.s32.totalorder %s92, %s95
      %p101 = scmp.eq.s32.totalorder %s14, 0
      %p102 = por %p100, %p101
      %p103 = scmp.ne.s32.totalorder %s92, %s95
      %p104 = scmp.eq.s32.totalorder %s19, 1
      %p105 = por %p103, %p104
      %p106 = scmp.ne.s32.totalorder %s95, %s96
      %p107 = scmp.eq.s32.totalorder %s19, 0
      %p108 = por %p106, %p107
      %p109 = scmp.ne.s32.totalorder %s95, %s96
      %p110 = scmp.eq.s32.totalorder %s20, 1
      %p111 = por %p109, %p110
      %p113 = scmp.ne.s32.totalorder %s96, %s112
      %p114 = scmp.eq.s32.totalorder %s20, 0
      %p115 = por %p113, %p114
      %p116 = scmp.le.s32.totalorder 1, %s14
      %p117 = scmp.lt.s32.totalorder %s14, 3
      %p118 = pnand %p116, %p117
      %p119 = pneg %p118
      // Predicated region
      $region9: #{tpu_custom_call.1} parent=5 // pred_check
        _
      $region10: #{tpu_custom_call.1} parent=5 // pred_check_branch
        %121 = sbr.rel (%p118) target = $region12
      $region11: #{tpu_custom_call.1} parent=5 // pred_region
        %s122 = ssub.s32 %s14, 1
      $region12: #{tpu_custom_call.1} parent=5 // pred_fallthru
        _
      %p123 = scmp.lt.s32.totalorder %s14, 2
      // Predicated region
      $region13: #{tpu_custom_call.1} parent=5 // pred_check
        %p124 = pneg %p123
      $region14: #{tpu_custom_call.1} parent=5 // pred_check_branch
        %126 = sbr.rel (%p124) target = $region16
      $region15: #{tpu_custom_call.1} parent=5 // pred_region
        // Predicated region
        $region17: #{tpu_custom_call.1} parent=15 // pred_check
          %p127 = pneg %p48
        $region18: #{tpu_custom_call.1} parent=15 // pred_check_branch
          %129 = sbr.rel (%p127) target = $region20
        $region19: #{tpu_custom_call.1} parent=15 // pred_region
          %s130 = sand.u32 %s38, 1
          %s131 = scalar_lea.sflag [#allocation3], %s130
          %s132 = sand.u32 %s38, 1
          %s133 = smul.addr %s132, 4
          %s134 = scalar_lea.vmem [#allocation2], %s133
          %s136 = ssub.s32 64, 64
          %137 = vsyncadd %s131, %s136
          %s138 = sadd.s32 %s22, %s21
          %s139 = smul.addr %s138, 64
          %s140 = scalar_lea.hbm %s0, %s139
          %s142 = sshll.u32 %s134, 4
          %s143 = int_to_ptr.vmem [resolvable:$true] %s142
          %145 = dma.hbm_to_vmem [thread:$0]  %s140, 64, %s143, %s131
        $region20: #{tpu_custom_call.1} parent=15 // pred_fallthru
          _
        // Predicated region
        $region21: #{tpu_custom_call.1} parent=15 // pred_check
          %p146 = pneg %p74
        $region22: #{tpu_custom_call.1} parent=15 // pred_check_branch
          %148 = sbr.rel (%p146) target = $region24
        $region23: #{tpu_custom_call.1} parent=15 // pred_region
          %p149 = scmp.lt.s32.totalorder %s21, 1
          %s150 = scalar_select %p149, %s21, 1
          %s151 = scalar_lea.vmem %s1, %s150
        $region24: #{tpu_custom_call.1} parent=15 // pred_fallthru
          _
      $region16: #{tpu_custom_call.1} parent=5 // pred_fallthru
        _
      %p152 = scmp.le.s32.totalorder 1, %s14
      %p153 = scmp.lt.s32.totalorder %s14, 3
      %p154 = pnand %p152, %p153
      %p155 = pneg %p154
      // Predicated region
      $region25: #{tpu_custom_call.1} parent=5 // pred_check
        _
      $region26: #{tpu_custom_call.1} parent=5 // pred_check_branch
        %157 = sbr.rel (%p154) target = $region28
      $region27: #{tpu_custom_call.1} parent=5 // pred_region
        %s158 = ssub.s32 %s14, 1
        %s159 = sand.u32 %s41, 1
        %s160 = scalar_lea.sflag [#allocation3], %s159
        %s161 = sand.u32 %s41, 1
        %s162 = smul.addr %s161, 4
        %s163 = scalar_lea.vmem [#allocation2], %s162
        // Predicated region
        $region29: #{tpu_custom_call.1} parent=27 // pred_check
          %p164 = pneg %p54
        $region30: #{tpu_custom_call.1} parent=27 // pred_check_branch
          %166 = sbr.rel (%p164) target = $region32
        $region31: #{tpu_custom_call.1} parent=27 // pred_region
          %167 = dma.done %s160, 64
        $region32: #{tpu_custom_call.1} parent=27 // pred_fallthru
          _
        %s168 = sand.u32 %s41, 1
        %s169 = scalar_lea.sflag [#allocation3], %s168
        %s170 = sand.u32 %s41, 1
        %s171 = smul.addr %s170, 4
        %s172 = scalar_lea.vmem [#allocation2], %s171
        %p173 = pneg %p54
        %p174 = pneg %p51
        %p175 = scmp.lt.s32.totalorder %s23, 1
        %s176 = scalar_select %p175, %s23, 1
        %s177 = scalar_lea.vmem %s1, %s176
        %p178 = pneg %p80
        %p179 = pneg %p77
        %p180 = pneg %p108
        %p181 = pneg %p105
        %s182 = sand.u32 %s95, 1
        %s183 = scalar_lea.sflag [#allocation4], %s182
        %s184 = sand.u32 %s95, 1
        %s185 = smul.addr %s184, 4
        %s186 = scalar_lea.vmem [#allocation5], %s185
        %p187 = scmp.lt.s32.totalorder %s23, 1
        %s188 = scalar_select %p187, %s23, 1
        %s189 = scalar_lea.vmem %s1, %s188
        %v190 = vld [vmem:[%s163] sm:$0xf]
        %v191 = vunpack.c.l.bf16 %v190
        %v192 = vld [vmem:[%s189] sm:$0x1]
        %v193 = vunpack.c.l.bf16 %v192
        %v194 = vmul.f32 %v191, %v191
        %vm195 = vcmask 261120
        %v196 = vsel %vm195, %v194, 0.0
        %197 = vadd.xlane.f32.xlu0 %v196
        %v198 = vpop.xlane.xlu0 %197
        %v199 = vmul.f32 %v198, 0.03125
        %v200 = vadd.f32 %v199, 1e-06
        %v201 = vrsqrt.pop %v200
        %v202 = vmul.f32 %v191, %v201
        %v203 = vadd.f32 %v193, 1.0
        %v204 = vlaneseq
        %v205 = vshrl.u32 %v204, 7
        %v206 = vsub.s32 0, %v205
        %v207 = vrot.slane %v203, %v206
        %v208 = vmul.f32 %v202, %v207
        %v209 = vpack.c.bf16 %v208, %v208
        %vm210 = vcmask 257024
        %211 = vst.msk [vmem:[%s186] sm:$0xf] %vm210, %v209
        %s212 = sand.u32 %s95, 1
        %s213 = scalar_lea.sflag [#allocation4], %s212
        %s214 = sand.u32 %s95, 1
        %s215 = smul.addr %s214, 4
        %s216 = scalar_lea.vmem [#allocation5], %s215
        // Predicated region
        $region33: #{tpu_custom_call.1} parent=27 // pred_check
          %p217 = pneg %p105
        $region34: #{tpu_custom_call.1} parent=27 // pred_check_branch
          %219 = sbr.rel (%p217) target = $region36
        $region35: #{tpu_custom_call.1} parent=27 // pred_region
          %s221 = ssub.s32 64, 64
          %222 = vsyncadd %s213, %s221
          %s223 = sadd.s32 %s24, %s23
          %s224 = smul.addr %s223, 64
          %s225 = scalar_lea.hbm %s2, %s224
          %s227 = sshll.u32 %s216, 4
          %s228 = int_to_ptr.vmem [resolvable:$true] %s227
          %230 = dma.vmem_to_hbm [thread:$0]  %s228, 64, %s225, %s213
        $region36: #{tpu_custom_call.1} parent=27 // pred_fallthru
          _
      $region28: #{tpu_custom_call.1} parent=5 // pred_fallthru
        _
      %p231 = scmp.le.s32.totalorder 2, %s14
      // Predicated region
      $region37: #{tpu_custom_call.1} parent=5 // pred_check
        %p232 = pneg %p231
      $region38: #{tpu_custom_call.1} parent=5 // pred_check_branch
        %234 = sbr.rel (%p232) target = $region40
      $region39: #{tpu_custom_call.1} parent=5 // pred_region
        %s235 = ssub.s32 %s14, 2
        // Predicated region
        $region41: #{tpu_custom_call.1} parent=39 // pred_check
          %p236 = pneg %p111
        $region42: #{tpu_custom_call.1} parent=39 // pred_check_branch
          %238 = sbr.rel (%p236) target = $region44
        $region43: #{tpu_custom_call.1} parent=39 // pred_region
          %s239 = sand.u32 %s96, 1
          %s240 = scalar_lea.sflag [#allocation4], %s239
          %s241 = sand.u32 %s96, 1
          %s242 = smul.addr %s241, 4
          %s243 = scalar_lea.vmem [#allocation5], %s242
          %244 = dma.done %s240, 64
        $region44: #{tpu_custom_call.1} parent=39 // pred_fallthru
          _
      $region40: #{tpu_custom_call.1} parent=5 // pred_fallthru
        _
    $region6: #{tpu_custom_call.1} parent=1 // loop_footer
      %s18 = sadd.s32 1, %s14
    $region7: #{tpu_custom_call.1} parent=1 // loop_footer_branch
      %13 = sbr.rel target = $region3
    $region8: #{tpu_custom_call.1} parent=1 // loop_exit
      _
    %245 = vsyncpa [#allocation3], 1
    %s246 = scalar_lea.sflag [#allocation3], 1
    %247 = vsyncpa %s246, 1
    %248 = vsyncpa [#allocation4], 1
    %s249 = scalar_lea.sflag [#allocation4], 1
    %250 = vsyncpa %s249, 1

</llo_original>
